<compile_context>
chip_gen: v7x
topology: tpu7x:2x2x1
jax: 0.10.0
libtpu: 0.0.40
codegen_flags: <defaults>
</compile_context>

<pallas_src>
import functools

import jax
import jax.numpy as jnp
from jax import lax
from jax.experimental import pallas as pl
from jax.experimental.pallas import tpu as pltpu


def _round_up(x, k):
    return (x + k - 1) // k * k


def _track_head_kernel(cat_ref, w1_ref, b1_ref, w2_ref, b2_ref,
                       match_ref, featx_ref, *, m, r):
    """Fused TrackHead forward for one image (one grid step).

    cat_ref   : [m+r, D]  flattened ROI feats; rows 0..m-1 = current frame,
                          rows m..m+r-1 = reference frame (compute dtype)
    w1_ref    : [D, Fp]   fc0 weight ([in, out], F zero-padded to Fp)
    b1_ref    : [1, Fp]   fc0 bias (f32)
    w2_ref    : [Fp, Fp]  fc1 weight
    b2_ref    : [1, Fp]   fc1 bias (f32)
    match_ref : [m, Rp]   match scores: col 0 = dummy non-match, cols 1..r =
                          x @ ref_x^T, cols r+1.. = zero padding
    featx_ref : [m, Fp]   post-FC features of the current frame (f32)
    """
    xcat = cat_ref[...]
    w1 = w1_ref[...]
    w2 = w2_ref[...]
    b1 = b1_ref[...]
    b2 = b2_ref[...]
    cdt = w1.dtype  # MXU input dtype (f32 or bf16)

    # fc0 -> ReLU -> fc1 for x and ref_x fused into a single (m+r)-row pass.
    # Bias add / ReLU stay f32 on the f32 MXU accumulator output.
    h = jnp.dot(xcat, w1, preferred_element_type=jnp.float32) + b1
    h = jnp.maximum(h, 0.0)
    feat = jnp.dot(h.astype(cdt), w2, preferred_element_type=jnp.float32) + b2

    fx = feat[:m]          # [m, Fp] current-frame features
    fr = feat[m:]          # [r, Fp] reference-frame features
    featx_ref[...] = fx

    # metric_type == 'vanilla': prod = x @ ref_x^T. Contract the feature axis
    # on both operands directly (no explicit transpose of fr).
    prod = lax.dot_general(
        fx.astype(cdt), fr.astype(cdt),
        dimension_numbers=(((1,), (1,)), ((), ())),
        preferred_element_type=jnp.float32)            # [m, r]

    # dynamic=True: prepend the all-zero dummy (non-match) column. Build the
    # full lane-padded row in registers and store once (lane-dense, unmasked).
    rp = match_ref.shape[1]
    pieces = [jnp.zeros((m, 1), jnp.float32), prod]
    if rp > r + 1:
        pieces.append(jnp.zeros((m, rp - r - 1), jnp.float32))
    match_ref[...] = jnp.concatenate(pieces, axis=1)


def track_head_batched(cat, w1, b1, w2, b2, *, m, r):
    """cat: [N, m+r, D] stacked (x ++ ref_x) flattened ROI features."""
    n_img, mr, d = cat.shape
    assert mr == m + r
    fp = w1.shape[1]
    rp = _round_up(r + 1, 128)

    kernel = functools.partial(_track_head_kernel, m=m, r=r)

    flops = n_img * (2 * mr * d * fp + 2 * mr * fp * fp + 2 * m * fp * r)
    bytes_accessed = (cat.size * cat.dtype.itemsize
                      + w1.size * w1.dtype.itemsize
                      + w2.size * w2.dtype.itemsize
                      + b1.size * b1.dtype.itemsize
                      + b2.size * b2.dtype.itemsize
                      + n_img * m * rp * 4
                      + n_img * m * fp * 4)

    match, feat_x = pl.pallas_call(
        kernel,
        out_shape=(
            jax.ShapeDtypeStruct((n_img, m, rp), jnp.float32),
            jax.ShapeDtypeStruct((n_img, m, fp), jnp.float32),
        ),
        grid=(n_img,),
        in_specs=[
            pl.BlockSpec((None, mr, d), lambda i: (i, 0, 0)),   # per-image ROI tile
            pl.BlockSpec((d, fp), lambda i: (0, 0)),            # weights: resident
            pl.BlockSpec((1, fp), lambda i: (0, 0)),
            pl.BlockSpec((fp, fp), lambda i: (0, 0)),
            pl.BlockSpec((1, fp), lambda i: (0, 0)),
        ],
        out_specs=(
            pl.BlockSpec((None, m, rp), lambda i: (i, 0, 0)),
            pl.BlockSpec((None, m, fp), lambda i: (i, 0, 0)),
        ),
        compiler_params=pltpu.CompilerParams(
            dimension_semantics=("parallel",)),
        cost_estimate=pl.CostEstimate(
            flops=flops, transcendentals=0, bytes_accessed=bytes_accessed),
    )(cat, w1, b1, w2, b2)
    return match, feat_x


class TrackHeadPallas:
    """JAX/Pallas port of TrackHead.forward (default-config path)."""

    def __init__(self, in_channels=4, roi_feat_size=4, fc_out_channels=32,
                 num_fcs=2, compute_dtype=jnp.float32, key=None):
        assert num_fcs == 2, "kernel is fused for the default num_fcs=2"
        self.in_dim = in_channels * roi_feat_size * roi_feat_size
        self.fc_out = fc_out_channels
        self.fp = _round_up(fc_out_channels, 128)   # lane-pad the feature dim
        self.compute_dtype = compute_dtype
        key = jax.random.PRNGKey(0) if key is None else key
        k1, k2 = jax.random.split(key)
        # init_weights(): normal(0, 0.01) weights, zero bias. Stored as
        # [in, out] (transposed vs nn.Linear) and zero-padded on the feature
        # axis so FC outputs / stores are lane-dense; padding is exact
        # (zero rows/cols contribute nothing to any matmul).
        w1 = 0.01 * jax.random.normal(k1, (self.in_dim, self.fc_out), jnp.float32)
        w2 = 0.01 * jax.random.normal(k2, (self.fc_out, self.fc_out), jnp.float32)
        self.w1 = jnp.zeros((self.in_dim, self.fp),
                            jnp.float32).at[:, :self.fc_out].set(w1)
        self.w2 = jnp.zeros((self.fp, self.fp),
                            jnp.float32).at[:self.fc_out, :self.fc_out].set(w2)
        self.b1 = jnp.zeros((1, self.fp), jnp.float32)
        self.b2 = jnp.zeros((1, self.fp), jnp.float32)

    def forward(self, x, ref_x, seg_result=None, ref_masks=None,
                memory_feats=None):
        # with_avg_pool=False path: seg_result / ref_masks / memory_feats unused.
        # TODO(synk): `map_out` is only assigned inside the with_avg_pool branch
        # of the original module; with the default config it is undefined, so we
        # return None rather than faking a value.
        map_out = None
        n_img = len(x)
        m = x[0].shape[0]
        r = ref_x[0].shape[0]
        # TODO(synk): the PyTorch module allows different ROI counts per image;
        # the batched kernel assumes uniform counts (ragged counts would need
        # padding + scalar-prefetched per-image lengths).
        assert all(xi.shape[0] == m for xi in x)
        assert all(ri.shape[0] == r for ri in ref_x)

        xs = jnp.stack([xi.reshape(m, -1) for xi in x])       # [N, m, D]
        rs = jnp.stack([ri.reshape(r, -1) for ri in ref_x])   # [N, r, D]
        cat = jnp.concatenate([xs, rs], axis=1).astype(self.compute_dtype)

        cdt = self.compute_dtype
        match_p, feat_p = track_head_batched(
            cat, self.w1.astype(cdt), self.b1, self.w2.astype(cdt), self.b2,
            m=m, r=r)

        match_score = [match_p[i, :, :r + 1] for i in range(n_img)]
        feats_x = [feat_p[i, :, :self.fc_out] for i in range(n_img)]
        exhaustive_score = None  # loss_type='ce'
        return match_score, feats_x, exhaustive_score, map_out


def _reference_forward(head, x, ref_x, compute_dtype=jnp.float32):
    """Pure-JAX reference (unpadded weights, same dtype roundings)."""
    f = head.fc_out
    w1 = head.w1[:, :f].astype(compute_dtype)
    w2 = head.w2[:f, :f].astype(compute_dtype)
    b1 = head.b1[:, :f]
    b2 = head.b2[:, :f]

    def mlp(v):
        h = jnp.dot(v.astype(compute_dtype), w1,
                    preferred_element_type=jnp.float32) + b1
        h = jnp.maximum(h, 0.0)
        return jnp.dot(h.astype(compute_dtype), w2,
                       preferred_element_type=jnp.float32) + b2

    match_score, feats = [], []
    for xi, rxi in zip(x, ref_x):
        fx = mlp(xi.reshape(xi.shape[0], -1))
        fr = mlp(rxi.reshape(rxi.shape[0], -1))
        prod = lax.dot_general(
            fx.astype(compute_dtype), fr.astype(compute_dtype),
            dimension_numbers=(((1,), (1,)), ((), ())),
            preferred_element_type=jnp.float32)
        match_score.append(
            jnp.concatenate([jnp.zeros((fx.shape[0], 1), jnp.float32), prod],
                            axis=1))
        feats.append(fx)
    return match_score, feats


if __name__ == "__main__":
    key = jax.random.PRNGKey(0)
    k_x0, k_x1, k_r0, k_r1, k_w = jax.random.split(key, 5)

    # Small synthetic shapes: 2 images, m=r=8 ROIs, C=4, roi_feat=4x4 (D=64).
    C, S = 4, 4
    x = [jax.random.normal(k_x0, (8, C, S, S), jnp.float32),
         jax.random.normal(k_x1, (8, C, S, S), jnp.float32)]
    ref_x = [jax.random.normal(k_r0, (8, C, S, S), jnp.float32),
             jax.random.normal(k_r1, (8, C, S, S), jnp.float32)]

    # --- f32 compute path (matches the PyTorch module numerics) ---
    head = TrackHeadPallas(in_channels=C, roi_feat_size=S, fc_out_channels=32,
                           key=k_w)
    match_score, feats_x, exhaustive_score, map_out = head.forward(x, ref_x)
    jax.block_until_ready(match_score)
    jax.block_until_ready(feats_x)

    ref_match, ref_feats = _reference_forward(head, x, ref_x)
    for a, b in zip(match_score, ref_match):
        assert a.shape == b.shape, "match_score shape mismatch"
        assert jnp.allclose(a, b, atol=1e-4, rtol=1e-3), "match_score mismatch"
    for a, b in zip(feats_x, ref_feats):
        assert a.shape == b.shape, "feature shape mismatch"
        assert jnp.allclose(a, b, atol=1e-4, rtol=1e-3), "feature mismatch"

    # --- bf16 MXU-input path (f32 accumulation), per v6e/v7x feedback ---
    head_bf16 = TrackHeadPallas(in_channels=C, roi_feat_size=S,
                                fc_out_channels=32,
                                compute_dtype=jnp.bfloat16, key=k_w)
    match_bf, feats_bf, _, _ = head_bf16.forward(x, ref_x)
    jax.block_until_ready(match_bf)
    jax.block_until_ready(feats_bf)
    ref_match_bf, ref_feats_bf = _reference_forward(
        head_bf16, x, ref_x, compute_dtype=jnp.bfloat16)
    for a, b in zip(match_bf, ref_match_bf):
        assert jnp.allclose(a, b, atol=1e-4, rtol=5e-2), "bf16 match mismatch"
    for a, b in zip(feats_bf, ref_feats_bf):
        assert jnp.allclose(a, b, atol=1e-4, rtol=5e-2), "bf16 feature mismatch"

    print("KERNEL_OK")
</pallas_src>

<mosaic_0001>
module attributes {stable_mosaic.version = 11 : i64} {
  func.func @_track_head_kernel(%arg0: i32, %arg1: memref<1x16x64xf32, #tpu.memory_space<vmem>>, %arg2: memref<64x128xf32, #tpu.memory_space<vmem>>, %arg3: memref<1x128xf32, #tpu.memory_space<vmem>>, %arg4: memref<128x128xf32, #tpu.memory_space<vmem>>, %arg5: memref<1x128xf32, #tpu.memory_space<vmem>>, %arg6: memref<1x8x128xf32, #tpu.memory_space<vmem>>, %arg7: memref<1x8x128xf32, #tpu.memory_space<vmem>>) attributes {dimension_semantics = [#tpu.dimension_semantics<parallel>], iteration_bounds = array<i64: 2>, scalar_prefetch = 0 : i64, scratch_operands = 0 : i64, tpu.core_type = #tpu.core_type<tc>, window_params = [{transform_indices = @transform_0, window_bounds = array<i64: 1, 16, 64>}, {pipeline_mode = #tpu.pipeline_mode<synchronous>, transform_indices = @transform_1, window_bounds = array<i64: 64, 128>}, {pipeline_mode = #tpu.pipeline_mode<synchronous>, transform_indices = @transform_2, window_bounds = array<i64: 1, 128>}, {pipeline_mode = #tpu.pipeline_mode<synchronous>, transform_indices = @transform_3, window_bounds = array<i64: 128, 128>}, {pipeline_mode = #tpu.pipeline_mode<synchronous>, transform_indices = @transform_4, window_bounds = array<i64: 1, 128>}, {transform_indices = @transform_5, window_bounds = array<i64: 1, 8, 128>}, {transform_indices = @transform_6, window_bounds = array<i64: 1, 8, 128>}]} {
    %c0 = arith.constant 0 : index
    %c0_0 = arith.constant 0 : index
    %c0_1 = arith.constant 0 : index
    %0 = vector.load %arg1[%c0, %c0_0, %c0_1] : memref<1x16x64xf32, #tpu.memory_space<vmem>>, vector<1x16x64xf32>
    %1 = vector.shape_cast %0 : vector<1x16x64xf32> to vector<16x64xf32>
    %c0_2 = arith.constant 0 : index
    %c0_3 = arith.constant 0 : index
    %2 = vector.load %arg2[%c0_2, %c0_3] : memref<64x128xf32, #tpu.memory_space<vmem>>, vector<64x128xf32>
    %c0_4 = arith.constant 0 : index
    %c0_5 = arith.constant 0 : index
    %3 = vector.load %arg4[%c0_4, %c0_5] : memref<128x128xf32, #tpu.memory_space<vmem>>, vector<128x128xf32>
    %c0_6 = arith.constant 0 : index
    %c0_7 = arith.constant 0 : index
    %4 = vector.load %arg3[%c0_6, %c0_7] : memref<1x128xf32, #tpu.memory_space<vmem>>, vector<1x128xf32>
    %c0_8 = arith.constant 0 : index
    %c0_9 = arith.constant 0 : index
    %5 = vector.load %arg5[%c0_8, %c0_9] : memref<1x128xf32, #tpu.memory_space<vmem>>, vector<1x128xf32>
    %cst = arith.constant dense<0.000000e+00> : vector<16x128xf32>
    %6 = tpu.matmul %1, %2, %cst {dimension_numbers = #tpu.dot_dimension_numbers<[1], [0], [0], [1], [0, 0, 1, 1], [], []>} : vector<16x64xf32>, vector<64x128xf32>, vector<16x128xf32> -> vector<16x128xf32>
    %7 = vector.broadcast %4 : vector<1x128xf32> to vector<16x128xf32>
    %8 = arith.addf %6, %7 : vector<16x128xf32>
    %cst_10 = arith.constant 0.000000e+00 : f32
    %9 = vector.broadcast %cst_10 : f32 to vector<16x128xf32>
    %10 = arith.maximumf %8, %9 : vector<16x128xf32>
    %cst_11 = arith.constant dense<0.000000e+00> : vector<16x128xf32>
    %11 = tpu.matmul %10, %3, %cst_11 {dimension_numbers = #tpu.dot_dimension_numbers<[1], [0], [0], [1], [0, 0, 1, 1], [], []>} : vector<16x128xf32>, vector<128x128xf32>, vector<16x128xf32> -> vector<16x128xf32>
    %12 = vector.broadcast %5 : vector<1x128xf32> to vector<16x128xf32>
    %13 = arith.addf %11, %12 : vector<16x128xf32>
    %14 = vector.extract_strided_slice %13 {offsets = [0, 0], sizes = [8, 128], strides = [1, 1]} : vector<16x128xf32> to vector<8x128xf32>
    %15 = vector.extract_strided_slice %13 {offsets = [8, 0], sizes = [8, 128], strides = [1, 1]} : vector<16x128xf32> to vector<8x128xf32>
    %c0_12 = arith.constant 0 : index
    %c0_13 = arith.constant 0 : index
    %c0_14 = arith.constant 0 : index
    %16 = vector.load %arg7[%c0_12, %c0_13, %c0_14] : memref<1x8x128xf32, #tpu.memory_space<vmem>>, vector<1x8x128xf32>
    %17 = vector.shape_cast %16 : vector<1x8x128xf32> to vector<8x128xf32>
    %18 = vector.shape_cast %14 : vector<8x128xf32> to vector<1x8x128xf32>
    tpu.vector_store %arg7[%c0_12, %c0_13, %c0_14], %18 {strides = array<i32>} : memref<1x8x128xf32, #tpu.memory_space<vmem>>, vector<1x8x128xf32>,
    %cst_15 = arith.constant dense<0.000000e+00> : vector<8x8xf32>
    %19 = tpu.matmul %14, %15, %cst_15 {dimension_numbers = #tpu.dot_dimension_numbers<[1], [1], [0], [0], [0, 0, 1, 0], [], []>} : vector<8x128xf32>, vector<8x128xf32>, vector<8x8xf32> -> vector<8x8xf32>
    %cst_16 = arith.constant 0.000000e+00 : f32
    %20 = vector.broadcast %cst_16 : f32 to vector<8x1xf32>
    %cst_17 = arith.constant 0.000000e+00 : f32
    %21 = vector.broadcast %cst_17 : f32 to vector<8x119xf32>
    %22 = tpu.concatenate %20, %19, %21 in 1 : vector<8x1xf32>, vector<8x8xf32>, vector<8x119xf32> -> vector<8x128xf32>
    %c0_18 = arith.constant 0 : index
    %c0_19 = arith.constant 0 : index
    %c0_20 = arith.constant 0 : index
    %23 = vector.load %arg6[%c0_18, %c0_19, %c0_20] : memref<1x8x128xf32, #tpu.memory_space<vmem>>, vector<1x8x128xf32>
    %24 = vector.shape_cast %23 : vector<1x8x128xf32> to vector<8x128xf32>
    %25 = vector.shape_cast %22 : vector<8x128xf32> to vector<1x8x128xf32>
    tpu.vector_store %arg6[%c0_18, %c0_19, %c0_20], %25 {strides = array<i32>} : memref<1x8x128xf32, #tpu.memory_space<vmem>>, vector<1x8x128xf32>,
    return
  }
  func.func @transform_0(%arg0: i32) -> (i32, i32, i32) {
    %c0_i32 = arith.constant 0 : i32
    %c0_i32_0 = arith.constant 0 : i32
    %c0_i32_1 = arith.constant 0 : i32
    return %arg0, %c0_i32, %c0_i32_0 : i32, i32, i32
  }
  func.func @transform_1(%arg0: i32) -> (i32, i32) {
    %c0_i32 = arith.constant 0 : i32
    %c0_i32_0 = arith.constant 0 : i32
    %c0_i32_1 = arith.constant 0 : i32
    return %c0_i32, %c0_i32_0 : i32, i32
  }
  func.func @transform_2(%arg0: i32) -> (i32, i32) {
    %c0_i32 = arith.constant 0 : i32
    %c0_i32_0 = arith.constant 0 : i32
    %c0_i32_1 = arith.constant 0 : i32
    return %c0_i32, %c0_i32_0 : i32, i32
  }
  func.func @transform_3(%arg0: i32) -> (i32, i32) {
    %c0_i32 = arith.constant 0 : i32
    %c0_i32_0 = arith.constant 0 : i32
    %c0_i32_1 = arith.constant 0 : i32
    return %c0_i32, %c0_i32_0 : i32, i32
  }
  func.func @transform_4(%arg0: i32) -> (i32, i32) {
    %c0_i32 = arith.constant 0 : i32
    %c0_i32_0 = arith.constant 0 : i32
    %c0_i32_1 = arith.constant 0 : i32
    return %c0_i32, %c0_i32_0 : i32, i32
  }
  func.func @transform_5(%arg0: i32) -> (i32, i32, i32) {
    %c0_i32 = arith.constant 0 : i32
    %c0_i32_0 = arith.constant 0 : i32
    %c0_i32_1 = arith.constant 0 : i32
    return %arg0, %c0_i32, %c0_i32_0 : i32, i32, i32
  }
  func.func @transform_6(%arg0: i32) -> (i32, i32, i32) {
    %c0_i32 = arith.constant 0 : i32
    %c0_i32_0 = arith.constant 0 : i32
    %c0_i32_1 = arith.constant 0 : i32
    return %arg0, %c0_i32, %c0_i32_0 : i32, i32, i32
  }
}

</mosaic_0001>

<llo_original>
// kernel: tpu_custom_call.1
$region0: #{tpu_custom_call.1}
  #allocation0 [shape = 'u32[]', space=smem, size = 0x4, offset = 0x4, fixed_abs, tag = 'smem constant byte address 0x4 - core index']
  #allocation1 [shape = 'u32[144,128]{1,0:T(1,128)}', space=vmem, size = 0x12000, scoped, tag = 'internal scratch']
  %s0 = inlined_call_operand.hbm [shape: f32[2,16,64], index: 0, kind: input, shape index: {}]
  %s1 = inlined_call_operand.hbm [shape: f32[64,128], index: 1, kind: input, shape index: {}]
  %s2 = inlined_call_operand.vmem [shape: f32[1,128], index: 2, kind: input, shape index: {}]
  %s3 = inlined_call_operand.hbm [shape: f32[128,128], index: 3, kind: input, shape index: {}]
  %s4 = inlined_call_operand.vmem [shape: f32[1,128], index: 4, kind: input, shape index: {}]
  %s5 = inlined_call_operand.hbm [shape: f32[2,8,128], index: 5, kind: output, shape index: {0}]
  %s6 = inlined_call_operand.hbm [shape: f32[2,8,128], index: 6, kind: output, shape index: {1}]
  %7 = xla_tuple %s5, %s6
  %s8 = sld [smem:[#allocation0]]
  $region73: #{tpu_custom_call.1} parent=0
    _
  %s10 = ssub.s32 1, %s8
  %s11 = scalar_select 0, %s10, %s8
  $region1: #{tpu_custom_call.1} parent=0
    #allocation2 [shape = 'u8[16384]{0}', space=vmem, size = 0x4000, scoped, tag = 'input window, operand 0']
    #allocation3 [shape = 's32[2]{0}', space=sflag, size = 0x8, scoped, tag = 'scoped memory for tpu_custom_call.1']
    #allocation4 [shape = 's32[2]{0}', space=sflag, size = 0x8, scoped, tag = 'scoped memory for tpu_custom_call.1']
    #allocation5 [shape = 'u8[32768]{0}', space=vmem, size = 0x8000, scoped, tag = 'input window, operand 1, single buffered']
    #allocation6 [shape = 's32[1]{0}', space=sflag, size = 0x4, scoped, tag = 'scoped memory for tpu_custom_call.1']
    #allocation7 [shape = 'u8[65536]{0}', space=vmem, size = 0x10000, scoped, tag = 'input window, operand 3, single buffered']
    #allocation8 [shape = 'u8[8192]{0}', space=vmem, size = 0x2000, scoped, tag = 'output window, operand 0']
    #allocation9 [shape = 'u8[8192]{0}', space=vmem, size = 0x2000, scoped, tag = 'output window, operand 1']
    #allocation10 [shape = 's32[2]{0}', space=sflag, size = 0x8, scoped, tag = 'scoped memory for tpu_custom_call.1']
    %12 = vsyncpa [#allocation3], 0
    %s13 = scalar_lea.sflag [#allocation3], 1
    %14 = vsyncpa %s13, 0
    %15 = vsyncpa [#allocation6], 0
    %16 = vsyncpa [#allocation4], 0
    %s17 = scalar_lea.sflag [#allocation4], 1
    %18 = vsyncpa %s17, 0
    %19 = vsyncpa [#allocation10], 0
    %s20 = scalar_lea.sflag [#allocation10], 1
    %21 = vsyncpa %s20, 0
    loop: start=0, step=1, limit=4
    $region2: #{tpu_custom_call.1} parent=1 // loop_pre_header
      _
    $region3: #{tpu_custom_call.1} parent=1 // loop_header
      %s23 = sphi 0, %s27
      %p24 = scmp.ge.s32.totalorder %s23, 4
      %s33 = sphi 0, %s35
      %s36 = sphi 0, %s33
      %s37 = sphi 0, %s36
      %s53 = sphi 0, %s37
      %s57 = sphi 0, %s57
      %s59 = sphi 0, %s57
      %s60 = sphi 0, %s59
      %s74 = sphi 0, %s60
      %s78 = sphi 0, %s78
      %s80 = sphi 0, %s78
      %s81 = sphi 0, %s80
      %s95 = sphi 0, %s81
      %s99 = sphi 0, %s99
      %s101 = sphi 0, %s99
      %s102 = sphi 0, %s101
      %s116 = sphi 0, %s102
      %s120 = sphi 0, %s120
      %s122 = sphi 0, %s120
      %s123 = sphi 0, %s122
      %s137 = sphi 0, %s123
      %s143 = sphi 0, %s145
      %s146 = sphi 0, %s143
      %s147 = sphi 0, %s146
      %s163 = sphi 0, %s147
      %s169 = sphi 0, %s171
      %s172 = sphi 0, %s169
      %s173 = sphi 0, %s172
      %s189 = sphi 0, %s173
    $region4: #{tpu_custom_call.1} parent=1 // loop_header_branch
      %26 = sbr.rel (%p24) target = $region8
    $region5: #{tpu_custom_call.1} parent=1 // loop_body
      %s28 = ssub.s32 %s23, 1
      %s29 = ssub.s32 %s23, 2
      %s30 = sadd.s32 %s23, 1
      %s31 = ssub.s32 %s23, %s30
      %p32 = scmp.eq.s32.totalorder %s31, 0
      %s34 = sadd.s32 %s33, 1
      %s35 = scalar_select %p32, %s33, %s34
      %p38 = pneg %p32
      %p39 = scmp.eq.s32.totalorder %s23, 1
      %p40 = por %p38, %p39
      %p41 = scmp.ne.s32.totalorder %s33, %s36
      %p42 = scmp.eq.s32.totalorder %s23, 0
      %p43 = por %p41, %p42
      %p44 = scmp.ne.s32.totalorder %s33, %s36
      %p45 = scmp.eq.s32.totalorder %s28, 1
      %p46 = por %p44, %p45
      %p47 = scmp.ne.s32.totalorder %s36, %s37
      %p48 = scmp.eq.s32.totalorder %s28, 0
      %p49 = por %p47, %p48
      %p50 = scmp.ne.s32.totalorder %s36, %s37
      %p51 = scmp.eq.s32.totalorder %s29, 1
      %p52 = por %p50, %p51
      %p54 = scmp.ne.s32.totalorder %s37, %s53
      %p55 = scmp.eq.s32.totalorder %s29, 0
      %p56 = por %p54, %p55
      %s58 = sadd.s32 %s57, 1
      %p61 = scmp.eq.s32.totalorder %s23, 1
      %p62 = scmp.ne.s32.totalorder %s57, %s59
      %p63 = scmp.eq.s32.totalorder %s23, 0
      %p64 = por %p62, %p63
      %p65 = scmp.ne.s32.totalorder %s57, %s59
      %p66 = scmp.eq.s32.totalorder %s28, 1
      %p67 = por %p65, %p66
      %p68 = scmp.ne.s32.totalorder %s59, %s60
      %p69 = scmp.eq.s32.totalorder %s28, 0
      %p70 = por %p68, %p69
      %p71 = scmp.ne.s32.totalorder %s59, %s60
      %p72 = scmp.eq.s32.totalorder %s29, 1
      %p73 = por %p71, %p72
      %p75 = scmp.ne.s32.totalorder %s60, %s74
      %p76 = scmp.eq.s32.totalorder %s29, 0
      %p77 = por %p75, %p76
      %s79 = sadd.s32 %s78, 1
      %p82 = scmp.eq.s32.totalorder %s23, 1
      %p83 = scmp.ne.s32.totalorder %s78, %s80
      %p84 = scmp.eq.s32.totalorder %s23, 0
      %p85 = por %p83, %p84
      %p86 = scmp.ne.s32.totalorder %s78, %s80
      %p87 = scmp.eq.s32.totalorder %s28, 1
      %p88 = por %p86, %p87
      %p89 = scmp.ne.s32.totalorder %s80, %s81
      %p90 = scmp.eq.s32.totalorder %s28, 0
      %p91 = por %p89, %p90
      %p92 = scmp.ne.s32.totalorder %s80, %s81
      %p93 = scmp.eq.s32.totalorder %s29, 1
      %p94 = por %p92, %p93
      %p96 = scmp.ne.s32.totalorder %s81, %s95
      %p97 = scmp.eq.s32.totalorder %s29, 0
      %p98 = por %p96, %p97
      %s100 = sadd.s32 %s99, 1
      %p103 = scmp.eq.s32.totalorder %s23, 1
      %p104 = scmp.ne.s32.totalorder %s99, %s101
      %p105 = scmp.eq.s32.totalorder %s23, 0
      %p106 = por %p104, %p105
      %p107 = scmp.ne.s32.totalorder %s99, %s101
      %p108 = scmp.eq.s32.totalorder %s28, 1
      %p109 = por %p107, %p108
      %p110 = scmp.ne.s32.totalorder %s101, %s102
      %p111 = scmp.eq.s32.totalorder %s28, 0
      %p112 = por %p110, %p111
      %p113 = scmp.ne.s32.totalorder %s101, %s102
      %p114 = scmp.eq.s32.totalorder %s29, 1
      %p115 = por %p113, %p114
      %p117 = scmp.ne.s32.totalorder %s102, %s116
      %p118 = scmp.eq.s32.totalorder %s29, 0
      %p119 = por %p117, %p118
      %s121 = sadd.s32 %s120, 1
      %p124 = scmp.eq.s32.totalorder %s23, 1
      %p125 = scmp.ne.s32.totalorder %s120, %s122
      %p126 = scmp.eq.s32.totalorder %s23, 0
      %p127 = por %p125, %p126
      %p128 = scmp.ne.s32.totalorder %s120, %s122
      %p129 = scmp.eq.s32.totalorder %s28, 1
      %p130 = por %p128, %p129
      %p131 = scmp.ne.s32.totalorder %s122, %s123
      %p132 = scmp.eq.s32.totalorder %s28, 0
      %p133 = por %p131, %p132
      %p134 = scmp.ne.s32.totalorder %s122, %s123
      %p135 = scmp.eq.s32.totalorder %s29, 1
      %p136 = por %p134, %p135
      %p138 = scmp.ne.s32.totalorder %s123, %s137
      %p139 = scmp.eq.s32.totalorder %s29, 0
      %p140 = por %p138, %p139
      %s141 = ssub.s32 %s23, %s30
      %p142 = scmp.eq.s32.totalorder %s141, 0
      %s144 = sadd.s32 %s143, 1
      %s145 = scalar_select %p142, %s143, %s144
      %p148 = pneg %p142
      %p149 = scmp.eq.s32.totalorder %s23, 1
      %p150 = por %p148, %p149
      %p151 = scmp.ne.s32.totalorder %s143, %s146
      %p152 = scmp.eq.s32.totalorder %s23, 0
      %p153 = por %p151, %p152
      %p154 = scmp.ne.s32.totalorder %s143, %s146
      %p155 = scmp.eq.s32.totalorder %s28, 1
      %p156 = por %p154, %p155
      %p157 = scmp.ne.s32.totalorder %s146, %s147
      %p158 = scmp.eq.s32.totalorder %s28, 0
      %p159 = por %p157, %p158
      %p160 = scmp.ne.s32.totalorder %s146, %s147
      %p161 = scmp.eq.s32.totalorder %s29, 1
      %p162 = por %p160, %p161
      %p164 = scmp.ne.s32.totalorder %s147, %s163
      %p165 = scmp.eq.s32.totalorder %s29, 0
      %p166 = por %p164, %p165
      %s167 = ssub.s32 %s23, %s30
      %p168 = scmp.eq.s32.totalorder %s167, 0
      %s170 = sadd.s32 %s169, 1
      %s171 = scalar_select %p168, %s169, %s170
      %p174 = pneg %p168
      %p175 = scmp.eq.s32.totalorder %s23, 1
      %p176 = por %p174, %p175
      %p177 = scmp.ne.s32.totalorder %s169, %s172
      %p178 = scmp.eq.s32.totalorder %s23, 0
      %p179 = por %p177, %p178
      %p180 = scmp.ne.s32.totalorder %s169, %s172
      %p181 = scmp.eq.s32.totalorder %s28, 1
      %p182 = por %p180, %p181
      %p183 = scmp.ne.s32.totalorder %s172, %s173
      %p184 = scmp.eq.s32.totalorder %s28, 0
      %p185 = por %p183, %p184
      %p186 = scmp.ne.s32.totalorder %s172, %s173
      %p187 = scmp.eq.s32.totalorder %s29, 1
      %p188 = por %p186, %p187
      %p190 = scmp.ne.s32.totalorder %s173, %s189
      %p191 = scmp.eq.s32.totalorder %s29, 0
      %p192 = por %p190, %p191
      %p193 = scmp.le.s32.totalorder 1, %s23
      %p194 = scmp.lt.s32.totalorder %s23, 3
      %p195 = pnand %p193, %p194
      %p196 = pneg %p195
      // Predicated region
      $region9: #{tpu_custom_call.1} parent=5 // pred_check
        _
      $region10: #{tpu_custom_call.1} parent=5 // pred_check_branch
        %198 = sbr.rel (%p195) target = $region12
      $region11: #{tpu_custom_call.1} parent=5 // pred_region
        %s199 = ssub.s32 %s23, 1
        // Predicated region
        $region13: #{tpu_custom_call.1} parent=11 // pred_check
          %p200 = pneg %p70
        $region14: #{tpu_custom_call.1} parent=11 // pred_check_branch
          %202 = sbr.rel (%p200) target = $region16
        $region15: #{tpu_custom_call.1} parent=11 // pred_region
          %s204 = ssub.s32 1024, 1024
          %205 = vsyncadd [#allocation6], %s204
          %s206 = sshll.u32 [#allocation5], 4
          %s207 = int_to_ptr.vmem [resolvable:$true] %s206
          %212 = dma.hbm_to_vmem [thread:$0]  %s1, 1024, %s207, [#allocation6], 128, 128, 8
        $region16: #{tpu_custom_call.1} parent=11 // pred_fallthru
          _
        // Predicated region
        $region17: #{tpu_custom_call.1} parent=11 // pred_check
          %p213 = pneg %p91
        $region18: #{tpu_custom_call.1} parent=11 // pred_check_branch
          %215 = sbr.rel (%p213) target = $region20
        $region19: #{tpu_custom_call.1} parent=11 // pred_region
          _
        $region20: #{tpu_custom_call.1} parent=11 // pred_fallthru
          _
        // Predicated region
        $region21: #{tpu_custom_call.1} parent=11 // pred_check
          %p216 = pneg %p112
        $region22: #{tpu_custom_call.1} parent=11 // pred_check_branch
          %218 = sbr.rel (%p216) target = $region24
        $region23: #{tpu_custom_call.1} parent=11 // pred_region
          %s220 = ssub.s32 2048, 2048
          %221 = vsyncadd [#allocation6], %s220
          %s222 = sshll.u32 [#allocation7], 4
          %s223 = int_to_ptr.vmem [resolvable:$true] %s222
          %228 = dma.hbm_to_vmem [thread:$0]  %s3, 2048, %s223, [#allocation6], 128, 128, 8
        $region24: #{tpu_custom_call.1} parent=11 // pred_fallthru
          _
        // Predicated region
        $region25: #{tpu_custom_call.1} parent=11 // pred_check
          %p229 = pneg %p133
        $region26: #{tpu_custom_call.1} parent=11 // pred_check_branch
          %231 = sbr.rel (%p229) target = $region28
        $region27: #{tpu_custom_call.1} parent=11 // pred_region
          _
        $region28: #{tpu_custom_call.1} parent=11 // pred_fallthru
          _
      $region12: #{tpu_custom_call.1} parent=5 // pred_fallthru
        _
      %p232 = scmp.lt.s32.totalorder %s23, 2
      // Predicated region
      $region29: #{tpu_custom_call.1} parent=5 // pred_check
        %p233 = pneg %p232
      $region30: #{tpu_custom_call.1} parent=5 // pred_check_branch
        %235 = sbr.rel (%p233) target = $region32
      $region31: #{tpu_custom_call.1} parent=5 // pred_region
        // Predicated region
        $region33: #{tpu_custom_call.1} parent=31 // pred_check
          %p236 = pneg %p43
        $region34: #{tpu_custom_call.1} parent=31 // pred_check_branch
          %238 = sbr.rel (%p236) target = $region36
        $region35: #{tpu_custom_call.1} parent=31 // pred_region
          %s239 = sand.u32 %s33, 1
          %s240 = scalar_lea.sflag [#allocation3], %s239
          %s241 = sand.u32 %s33, 1
          %s242 = smul.addr %s241, 16
          %s243 = scalar_lea.vmem [#allocation2], %s242
          %s245 = ssub.s32 256, 256
          %246 = vsyncadd %s240, %s245
          %s247 = smul.addr %s23, 2
          %s248 = smul.addr %s247, 128
          %s249 = scalar_lea.hbm %s0, %s248
          %s250 = sshll.u32 %s243, 4
          %s251 = int_to_ptr.vmem [resolvable:$true] %s250
          %256 = dma.hbm_to_vmem [thread:$0]  %s249, 256, %s251, %s240, 128, 128, 8
        $region36: #{tpu_custom_call.1} parent=31 // pred_fallthru
          _
      $region32: #{tpu_custom_call.1} parent=5 // pred_fallthru
        _
      %p257 = scmp.le.s32.totalorder 1, %s23
      %p258 = scmp.lt.s32.totalorder %s23, 3
      %p259 = pnand %p257, %p258
      %p260 = pneg %p259
      // Predicated region
      $region37: #{tpu_custom_call.1} parent=5 // pred_check
        _
      $region38: #{tpu_custom_call.1} parent=5 // pred_check_branch
        %262 = sbr.rel (%p259) target = $region40
      $region39: #{tpu_custom_call.1} parent=5 // pred_region
        %s263 = ssub.s32 %s23, 1
        %s264 = sand.u32 %s36, 1
        %s265 = scalar_lea.sflag [#allocation3], %s264
        %s266 = sand.u32 %s36, 1
        %s267 = smul.addr %s266, 16
        %s268 = scalar_lea.vmem [#allocation2], %s267
        // Predicated region
        $region41: #{tpu_custom_call.1} parent=39 // pred_check
          %p269 = pneg %p49
        $region42: #{tpu_custom_call.1} parent=39 // pred_check_branch
          %271 = sbr.rel (%p269) target = $region44
        $region43: #{tpu_custom_call.1} parent=39 // pred_region
          %272 = dma.done %s265, 256
        $region44: #{tpu_custom_call.1} parent=39 // pred_fallthru
          _
        // Predicated region
        $region45: #{tpu_custom_call.1} parent=39 // pred_check
          %p273 = pneg %p70
        $region46: #{tpu_custom_call.1} parent=39 // pred_check_branch
          %275 = sbr.rel (%p273) target = $region48
        $region47: #{tpu_custom_call.1} parent=39 // pred_region
          %276 = dma.done [#allocation6], 1024
        $region48: #{tpu_custom_call.1} parent=39 // pred_fallthru
          _
        // Predicated region
        $region49: #{tpu_custom_call.1} parent=39 // pred_check
          %p277 = pneg %p112
        $region50: #{tpu_custom_call.1} parent=39 // pred_check_branch
          %279 = sbr.rel (%p277) target = $region52
        $region51: #{tpu_custom_call.1} parent=39 // pred_region
          %280 = dma.done [#allocation6], 2048
        $region52: #{tpu_custom_call.1} parent=39 // pred_fallthru
          _
        %s281 = sand.u32 %s36, 1
        %s282 = scalar_lea.sflag [#allocation3], %s281
        %s283 = sand.u32 %s36, 1
        %s284 = smul.addr %s283, 16
        %s285 = scalar_lea.vmem [#allocation2], %s284
        %p286 = pneg %p49
        %p287 = pneg %p46
        %p288 = pneg %p70
        %p289 = pneg %p67
        %p290 = pneg %p91
        %p291 = pneg %p88
        %p292 = pneg %p112
        %p293 = pneg %p109
        %p294 = pneg %p133
        %p295 = pneg %p130
        %p296 = pneg %p159
        %p297 = pneg %p156
        %s298 = sand.u32 %s146, 1
        %s299 = scalar_lea.sflag [#allocation4], %s298
        %s300 = sand.u32 %s146, 1
        %s301 = smul.addr %s300, 8
        %s302 = scalar_lea.vmem [#allocation8], %s301
        %p303 = pneg %p185
        %p304 = pneg %p182
        %s305 = sand.u32 %s172, 1
        %s306 = scalar_lea.sflag [#allocation10], %s305
        %s307 = sand.u32 %s172, 1
        %s308 = smul.addr %s307, 8
        %s309 = scalar_lea.vmem [#allocation9], %s308
        %v310 = vld [vmem:[%s268] sm:$0xff]
        %v311 = vld [vmem:[%s268 + $0x8] sm:$0xff]
        %v312 = vld [vmem:[#allocation5] sm:$0xff]
        %v313 = vld [vmem:[#allocation5 + $0x8] sm:$0xff]
        %v314 = vld [vmem:[#allocation5 + $0x10] sm:$0xff]
        %v315 = vld [vmem:[#allocation5 + $0x18] sm:$0xff]
        %v316 = vld [vmem:[#allocation5 + $0x20] sm:$0xff]
        %v317 = vld [vmem:[#allocation5 + $0x28] sm:$0xff]
        %v318 = vld [vmem:[#allocation5 + $0x30] sm:$0xff]
        %v319 = vld [vmem:[#allocation5 + $0x38] sm:$0xff]
        %v320 = vld [vmem:[#allocation7] sm:$0xff]
        %v321 = vld [vmem:[#allocation7 + $0x8] sm:$0xff]
        %v322 = vld [vmem:[#allocation7 + $0x10] sm:$0xff]
        %v323 = vld [vmem:[#allocation7 + $0x18] sm:$0xff]
        %v324 = vld [vmem:[#allocation7 + $0x20] sm:$0xff]
        %v325 = vld [vmem:[#allocation7 + $0x28] sm:$0xff]
        %v326 = vld [vmem:[#allocation7 + $0x30] sm:$0xff]
        %v327 = vld [vmem:[#allocation7 + $0x38] sm:$0xff]
        %v328 = vld [vmem:[#allocation7 + $0x40] sm:$0xff]
        %v329 = vld [vmem:[#allocation7 + $0x48] sm:$0xff]
        %v330 = vld [vmem:[#allocation7 + $0x50] sm:$0xff]
        %v331 = vld [vmem:[#allocation7 + $0x58] sm:$0xff]
        %v332 = vld [vmem:[#allocation7 + $0x60] sm:$0xff]
        %v333 = vld [vmem:[#allocation7 + $0x68] sm:$0xff]
        %v334 = vld [vmem:[#allocation7 + $0x70] sm:$0xff]
        %v335 = vld [vmem:[#allocation7 + $0x78] sm:$0xff]
        %v336 = vld [vmem:[%s2] sm:$0x1]
        %v337 = vld [vmem:[%s4] sm:$0x1]
        %v339 = vlaneseq
        %v340 = vshrl.u32 %v339, 7
        %v341 = vsub.s32 0, %v340
        %v342 = vrot.slane %v336, %v341
        %vm344 = vcmask 523264
        %v346 = vsel %vm344, %v310, 0
        %v349 = vsel %vm344, %v311, 0
        %351 = vmatprep.subr.mxu0 0.0
        %352 = vmatpush1.msra.mxu0 %v312
        %353 = vmatprep.subr.mxu0 0.0
        %354 = vmatpush1.msra.mxu0 %v313
        %355 = vmatprep.subr.mxu0 0.0
        %356 = vmatpush1.msra.mxu0 %v314
        %357 = vmatprep.subr.mxu0 0.0
        %358 = vmatpush1.msra.mxu0 %v315
        %359 = vmatprep.subr.mxu0 0.0
        %360 = vmatpush1.msra.mxu0 %v316
        %361 = vmatprep.subr.mxu0 0.0
        %362 = vmatpush1.msra.mxu0 %v317
        %363 = vmatprep.subr.mxu0 0.0
        %364 = vmatpush1.msra.mxu0 %v318
        %365 = vmatprep.subr.mxu0 0.0
        %366 = vmatpush1.msra.mxu0 %v319
        %367 = vmatprep.subr.mxu0 0.0
        %368 = vmatpush1.msra.mxu0 0.0
        %369 = vmatprep.subr.mxu0 0.0
        %370 = vmatpush1.msra.mxu0 0.0
        %371 = vmatprep.subr.mxu0 0.0
        %372 = vmatpush1.msra.mxu0 0.0
        %373 = vmatprep.subr.mxu0 0.0
        %374 = vmatpush1.msra.mxu0 0.0
        %375 = vmatprep.subr.mxu0 0.0
        %376 = vmatpush1.msra.mxu0 0.0
        %377 = vmatprep.subr.mxu0 0.0
        %378 = vmatpush1.msra.mxu0 0.0
        %379 = vmatprep.subr.mxu0 0.0
        %380 = vmatpush1.msra.mxu0 0.0
        %381 = vmatprep.subr.mxu0 0.0
        %382 = vmatpush1.msra.mxu0 0.0
        %383 = vmatprep.subr.mxu0 0.0
        %384 = vmatpush1.msra.mxu0 0.0
        %385 = vmatprep.subr.mxu0 0.0
        %386 = vmatpush1.msra.mxu0 0.0
        %387 = vmatprep.subr.mxu0 0.0
        %388 = vmatpush1.msra.mxu0 0.0
        %389 = vmatprep.subr.mxu0 0.0
        %390 = vmatpush1.msra.mxu0 0.0
        %391 = vmatprep.subr.mxu0 0.0
        %392 = vmatpush1.msra.mxu0 0.0
        %393 = vmatprep.subr.mxu0 0.0
        %394 = vmatpush1.msra.mxu0 0.0
        %395 = vmatprep.subr.mxu0 0.0
        %396 = vmatpush1.msra.mxu0 0.0
        %397 = vmatprep.subr.mxu0 0.0
        %398 = vmatpush1.msra.mxu0 0.0
        %399 = vmatprep.subr.mxu0 0.0
        %400 = vmatpush1.msra.mxu0 0.0
        %401 = vmatprep.subr.mxu0 0.0
        %402 = vmatpush1.msra.mxu0 0.0
        %403 = vmatprep.subr.mxu0 0.0
        %404 = vmatpush1.msra.mxu0 0.0
        %405 = vmatprep.subr.mxu0 0.0
        %406 = vmatpush1.msra.mxu0 0.0
        %407 = vmatprep.subr.mxu0 0.0
        %408 = vmatpush1.msra.mxu0 0.0
        %409 = vmatprep.subr.mxu0 0.0
        %410 = vmatpush1.msra.mxu0 0.0
        %411 = vmatprep.subr.mxu0 0.0
        %412 = vmatpush1.msra.mxu0 0.0
        %413 = vmatprep.subr.mxu0 0.0
        %414 = vmatpush1.msra.mxu0 0.0
        %415 = vmatprep.mubr.f32.mxu0 0.0
        %416 = vmatmul.mubr.f32.gmra.mrb[0].mxu0 %v346
        %v417 = vpop.f32.mrb[0].mxu0
        %v418 = vadd.f32 %v342, %v417
        %v419 = vpop.f32.mrb[0].mxu0
        %420 = vmatprep.mubr.f32.mxu0 0.0
        %421 = vmatmul.mubr.f32.gmra.mrb[0].mxu0 %v349
        %v422 = vpop.f32.mrb[0].mxu0
        %v423 = vadd.f32 %v342, %v422
        %v424 = vpop.f32.mrb[0].mxu0
        %425 = vdwg.mxu0
        %v426 = vmax.f32 %v418, 0.0
        %v427 = vmax.f32 %v423, 0.0
        %v429 = vlaneseq
        %v430 = vshrl.u32 %v429, 7
        %v431 = vsub.s32 0, %v430
        %v432 = vrot.slane %v337, %v431
        %434 = vmatprep.subr.mxu0 0.0
        %435 = vmatpush1.msra.mxu0 %v320
        %436 = vmatprep.subr.mxu0 0.0
        %437 = vmatpush1.msra.mxu0 %v321
        %438 = vmatprep.subr.mxu0 0.0
        %439 = vmatpush1.msra.mxu0 %v322
        %440 = vmatprep.subr.mxu0 0.0
        %441 = vmatpush1.msra.mxu0 %v323
        %442 = vmatprep.subr.mxu0 0.0
        %443 = vmatpush1.msra.mxu0 %v324
        %444 = vmatprep.subr.mxu0 0.0
        %445 = vmatpush1.msra.mxu0 %v325
        %446 = vmatprep.subr.mxu0 0.0
        %447 = vmatpush1.msra.mxu0 %v326
        %448 = vmatprep.subr.mxu0 0.0
        %449 = vmatpush1.msra.mxu0 %v327
        %450 = vmatprep.subr.mxu0 0.0
        %451 = vmatpush1.msra.mxu0 %v328
        %452 = vmatprep.subr.mxu0 0.0
        %453 = vmatpush1.msra.mxu0 %v329
        %454 = vmatprep.subr.mxu0 0.0
        %455 = vmatpush1.msra.mxu0 %v330
        %456 = vmatprep.subr.mxu0 0.0
        %457 = vmatpush1.msra.mxu0 %v331
        %458 = vmatprep.subr.mxu0 0.0
        %459 = vmatpush1.msra.mxu0 %v332
        %460 = vmatprep.subr.mxu0 0.0
        %461 = vmatpush1.msra.mxu0 %v333
        %462 = vmatprep.subr.mxu0 0.0
        %463 = vmatpush1.msra.mxu0 %v334
        %464 = vmatprep.subr.mxu0 0.0
        %465 = vmatpush1.msra.mxu0 %v335
        %466 = vmatprep.subr.mxu0 0.0
        %467 = vmatpush1.msra.mxu0 0.0
        %468 = vmatprep.subr.mxu0 0.0
        %469 = vmatpush1.msra.mxu0 0.0
        %470 = vmatprep.subr.mxu0 0.0
        %471 = vmatpush1.msra.mxu0 0.0
        %472 = vmatprep.subr.mxu0 0.0
        %473 = vmatpush1.msra.mxu0 0.0
        %474 = vmatprep.subr.mxu0 0.0
        %475 = vmatpush1.msra.mxu0 0.0
        %476 = vmatprep.subr.mxu0 0.0
        %477 = vmatpush1.msra.mxu0 0.0
        %478 = vmatprep.subr.mxu0 0.0
        %479 = vmatpush1.msra.mxu0 0.0
        %480 = vmatprep.subr.mxu0 0.0
        %481 = vmatpush1.msra.mxu0 0.0
        %482 = vmatprep.subr.mxu0 0.0
        %483 = vmatpush1.msra.mxu0 0.0
        %484 = vmatprep.subr.mxu0 0.0
        %485 = vmatpush1.msra.mxu0 0.0
        %486 = vmatprep.subr.mxu0 0.0
        %487 = vmatpush1.msra.mxu0 0.0
        %488 = vmatprep.subr.mxu0 0.0
        %489 = vmatpush1.msra.mxu0 0.0
        %490 = vmatprep.subr.mxu0 0.0
        %491 = vmatpush1.msra.mxu0 0.0
        %492 = vmatprep.subr.mxu0 0.0
        %493 = vmatpush1.msra.mxu0 0.0
        %494 = vmatprep.subr.mxu0 0.0
        %495 = vmatpush1.msra.mxu0 0.0
        %496 = vmatprep.subr.mxu0 0.0
        %497 = vmatpush1.msra.mxu0 0.0
        %498 = vmatprep.mubr.f32.mxu0 0.0
        %499 = vmatmul.mubr.f32.gmra.mrb[0].mxu0 %v426
        %v500 = vpop.f32.mrb[0].mxu0
        %v501 = vadd.f32 %v432, %v500
        %v502 = vpop.f32.mrb[0].mxu0
        %503 = vmatprep.mubr.f32.mxu0 0.0
        %504 = vmatmul.mubr.f32.gmra.mrb[0].mxu0 %v427
        %v505 = vpop.f32.mrb[0].mxu0
        %v506 = vadd.f32 %v432, %v505
        %v507 = vpop.f32.mrb[0].mxu0
        %508 = vdwg.mxu0
        %509 = vst [vmem:[%s309] sm:$0xff] %v501
        %510 = vmatprep.subr.mxu0 0.0
        %511 = vmatpush1.xpose.msra.mxu0 %v506
        %512 = vmatprep.subr.mxu0 0.0
        %513 = vmatpush1.xpose.msra.mxu0 0.0
        %514 = vmatprep.subr.mxu0 0.0
        %515 = vmatpush1.xpose.msra.mxu0 0.0
        %516 = vmatprep.subr.mxu0 0.0
        %517 = vmatpush1.xpose.msra.mxu0 0.0
        %518 = vmatprep.subr.mxu0 0.0
        %519 = vmatpush1.xpose.msra.mxu0 0.0
        %520 = vmatprep.subr.mxu0 0.0
        %521 = vmatpush1.xpose.msra.mxu0 0.0
        %522 = vmatprep.subr.mxu0 0.0
        %523 = vmatpush1.xpose.msra.mxu0 0.0
        %524 = vmatprep.subr.mxu0 0.0
        %525 = vmatpush1.xpose.msra.mxu0 0.0
        %526 = vmatprep.subr.mxu0 0.0
        %527 = vmatpush1.xpose.msra.mxu0 0.0
        %528 = vmatprep.subr.mxu0 0.0
        %529 = vmatpush1.xpose.msra.mxu0 0.0
        %530 = vmatprep.subr.mxu0 0.0
        %531 = vmatpush1.xpose.msra.mxu0 0.0
        %532 = vmatprep.subr.mxu0 0.0
        %533 = vmatpush1.xpose.msra.mxu0 0.0
        %534 = vmatprep.subr.mxu0 0.0
        %535 = vmatpush1.xpose.msra.mxu0 0.0
        %536 = vmatprep.subr.mxu0 0.0
        %537 = vmatpush1.xpose.msra.mxu0 0.0
        %538 = vmatprep.subr.mxu0 0.0
        %539 = vmatpush1.xpose.msra.mxu0 0.0
        %540 = vmatprep.subr.mxu0 0.0
        %541 = vmatpush1.xpose.msra.mxu0 0.0
        %542 = vmatprep.subr.mxu0 0.0
        %543 = vmatpush1.xpose.msra.mxu0 0.0
        %544 = vmatprep.subr.mxu0 0.0
        %545 = vmatpush1.xpose.msra.mxu0 0.0
        %546 = vmatprep.subr.mxu0 0.0
        %547 = vmatpush1.xpose.msra.mxu0 0.0
        %548 = vmatprep.subr.mxu0 0.0
        %549 = vmatpush1.xpose.msra.mxu0 0.0
        %550 = vmatprep.subr.mxu0 0.0
        %551 = vmatpush1.xpose.msra.mxu0 0.0
        %552 = vmatprep.subr.mxu0 0.0
        %553 = vmatpush1.xpose.msra.mxu0 0.0
        %554 = vmatprep.subr.mxu0 0.0
        %555 = vmatpush1.xpose.msra.mxu0 0.0
        %556 = vmatprep.subr.mxu0 0.0
        %557 = vmatpush1.xpose.msra.mxu0 0.0
        %558 = vmatprep.subr.mxu0 0.0
        %559 = vmatpush1.xpose.msra.mxu0 0.0
        %560 = vmatprep.subr.mxu0 0.0
        %561 = vmatpush1.xpose.msra.mxu0 0.0
        %562 = vmatprep.subr.mxu0 0.0
        %563 = vmatpush1.xpose.msra.mxu0 0.0
        %564 = vmatprep.subr.mxu0 0.0
        %565 = vmatpush1.xpose.msra.mxu0 0.0
        %566 = vmatprep.subr.mxu0 0.0
        %567 = vmatpush1.xpose.msra.mxu0 0.0
        %568 = vmatprep.subr.mxu0 0.0
        %569 = vmatpush1.xpose.msra.mxu0 0.0
        %570 = vmatprep.subr.mxu0 0.0
        %571 = vmatpush1.xpose.msra.mxu0 0.0
        %572 = vmatprep.subr.mxu0 0.0
        %573 = vmatpush1.xpose.msra.mxu0 0.0
        %574 = vmatprep.mubr.f32.mxu0 0.0
        %575 = vmatmul.mubr.f32.gmra.mrb[0].mxu0 %v501
        %v576 = vpop.f32.mrb[0].mxu0
        %v577 = vadd.f32 0.0, %v576
        %v578 = vpop.f32.mrb[0].mxu0
        %579 = vdwg.mxu0
        %581 = vrot.lane.b32.xlu0 %v577, 1
        %v582 = vpop.permute.xlu0 %581
        %vm584 = vcmask 7168
        %v585 = vsel %vm584, 0.0, %v582
        %vm586 = vcmask 72704
        %v587 = vsel %vm586, %v585, 0.0
        %588 = vst [vmem:[%s302] sm:$0xff] %v587
        %s589 = sand.u32 %s146, 1
        %s590 = scalar_lea.sflag [#allocation4], %s589
        %s591 = sand.u32 %s146, 1
        %s592 = smul.addr %s591, 8
        %s593 = scalar_lea.vmem [#allocation8], %s592
        %s594 = sand.u32 %s172, 1
        %s595 = scalar_lea.sflag [#allocation10], %s594
        %s596 = sand.u32 %s172, 1
        %s597 = smul.addr %s596, 8
        %s598 = scalar_lea.vmem [#allocation9], %s597
        // Predicated region
        $region53: #{tpu_custom_call.1} parent=39 // pred_check
          %p599 = pneg %p156
        $region54: #{tpu_custom_call.1} parent=39 // pred_check_branch
          %601 = sbr.rel (%p599) target = $region56
        $region55: #{tpu_custom_call.1} parent=39 // pred_region
          %s603 = ssub.s32 128, 128
          %604 = vsyncadd %s590, %s603
          %s605 = smul.addr %s28, 128
          %s606 = scalar_lea.hbm %s5, %s605
          %s608 = sshll.u32 %s593, 4
          %s609 = int_to_ptr.vmem [resolvable:$true] %s608
          %611 = dma.vmem_to_hbm [thread:$0]  %s609, 128, %s606, %s590
        $region56: #{tpu_custom_call.1} parent=39 // pred_fallthru
          _
        // Predicated region
        $region57: #{tpu_custom_call.1} parent=39 // pred_check
          %p612 = pneg %p182
        $region58: #{tpu_custom_call.1} parent=39 // pred_check_branch
          %614 = sbr.rel (%p612) target = $region60
        $region59: #{tpu_custom_call.1} parent=39 // pred_region
          %s616 = ssub.s32 128, 128
          %617 = vsyncadd %s595, %s616
          %s618 = smul.addr %s28, 128
          %s619 = scalar_lea.hbm %s6, %s618
          %s621 = sshll.u32 %s598, 4
          %s622 = int_to_ptr.vmem [resolvable:$true] %s621
          %624 = dma.vmem_to_hbm [thread:$0]  %s622, 128, %s619, %s595
        $region60: #{tpu_custom_call.1} parent=39 // pred_fallthru
          _
      $region40: #{tpu_custom_call.1} parent=5 // pred_fallthru
        _
      %p625 = scmp.le.s32.totalorder 2, %s23
      // Predicated region
      $region61: #{tpu_custom_call.1} parent=5 // pred_check
        %p626 = pneg %p625
      $region62: #{tpu_custom_call.1} parent=5 // pred_check_branch
        %628 = sbr.rel (%p626) target = $region64
      $region63: #{tpu_custom_call.1} parent=5 // pred_region
        %s629 = ssub.s32 %s23, 2
        // Predicated region
        $region65: #{tpu_custom_call.1} parent=63 // pred_check
          %p630 = pneg %p162
        $region66: #{tpu_custom_call.1} parent=63 // pred_check_branch
          %632 = sbr.rel (%p630) target = $region68
        $region67: #{tpu_custom_call.1} parent=63 // pred_region
          %s633 = sand.u32 %s147, 1
          %s634 = scalar_lea.sflag [#allocation4], %s633
          %s635 = sand.u32 %s147, 1
          %s636 = smul.addr %s635, 8
          %s637 = scalar_lea.vmem [#allocation8], %s636
          %638 = dma.done %s634, 128
        $region68: #{tpu_custom_call.1} parent=63 // pred_fallthru
          _
        // Predicated region
        $region69: #{tpu_custom_call.1} parent=63 // pred_check
          %p639 = pneg %p188
        $region70: #{tpu_custom_call.1} parent=63 // pred_check_branch
          %641 = sbr.rel (%p639) target = $region72
        $region71: #{tpu_custom_call.1} parent=63 // pred_region
          %s642 = sand.u32 %s173, 1
          %s643 = scalar_lea.sflag [#allocation10], %s642
          %s644 = sand.u32 %s173, 1
          %s645 = smul.addr %s644, 8
          %s646 = scalar_lea.vmem [#allocation9], %s645
          %647 = dma.done %s643, 128
        $region72: #{tpu_custom_call.1} parent=63 // pred_fallthru
          _
      $region64: #{tpu_custom_call.1} parent=5 // pred_fallthru
        _
    $region6: #{tpu_custom_call.1} parent=1 // loop_footer
      %s27 = sadd.s32 1, %s23
    $region7: #{tpu_custom_call.1} parent=1 // loop_footer_branch
      %22 = sbr.rel target = $region3
    $region8: #{tpu_custom_call.1} parent=1 // loop_exit
      _
    %648 = vsyncpa [#allocation3], 1
    %s649 = scalar_lea.sflag [#allocation3], 1
    %650 = vsyncpa %s649, 1
    %651 = vsyncpa [#allocation6], 1
    %652 = vsyncpa [#allocation4], 1
    %s653 = scalar_lea.sflag [#allocation4], 1
    %654 = vsyncpa %s653, 1
    %655 = vsyncpa [#allocation10], 1
    %s656 = scalar_lea.sflag [#allocation10], 1
    %657 = vsyncpa %s656, 1

</llo_original>
